<compile_context>
chip_gen: v6e
topology: v6e:2x2x1
jax: 0.10.0
libtpu: 0.0.40
codegen_flags: <defaults>
</compile_context>

<pallas_src>
import functools
import math

import jax
import jax.numpy as jnp
from jax.experimental import pallas as pl
from jax.experimental.pallas import tpu as pltpu


def _round_up(x, m):
    return ((x + m - 1) // m) * m


def _round_down(x, m):
    return (x // m) * m


# Probe once whether this jax build supports single-buffered BlockSpecs.
try:
    pl.BlockSpec((8, 128), lambda i: (0, 0), pipeline_mode=pl.Buffered(1))
    _SINGLE_BUFFER_OK = True
except Exception:  # older jax without pipeline_mode / Buffered
    _SINGLE_BUFFER_OK = False


def _resident_spec(block_shape):
    """BlockSpec for a grid-invariant operand (weights/biases): constant
    index_map (never re-DMA'd) and single-buffered when supported."""
    if _SINGLE_BUFFER_OK:
        return pl.BlockSpec(block_shape, lambda i: (0, 0),
                            pipeline_mode=pl.Buffered(1))
    return pl.BlockSpec(block_shape, lambda i: (0, 0))


def _vmem_capacity_bytes():
    try:
        return int(pltpu.get_tpu_info().vmem_capacity_bytes)
    except Exception:
        return 64 * 1024 * 1024          # v7x-sized conservative fallback


def _device_kind():
    try:
        return jax.devices()[0].device_kind.lower()
    except Exception:
        return ""


def _ffn_kernel(*refs, apply_dropout):
    if apply_dropout:
        x_ref, w1_ref, b1_ref, w2_ref, b2_ref, mask_ref, o_ref = refs
    else:
        x_ref, w1_ref, b1_ref, w2_ref, b2_ref, o_ref = refs

    # fc1 + bias + ReLU, accumulated in f32 (biases are already f32).
    h = jnp.dot(x_ref[...], w1_ref[...], preferred_element_type=jnp.float32)
    h = jnp.maximum(h + b1_ref[...], 0.0)

    # Cast the (tile_m, d_ff) intermediate to the activation dtype before the
    # elementwise dropout and the second matmul (halves VALU/vreg pressure for
    # bf16 activations; no-op for f32).
    h = h.astype(w2_ref.dtype)
    if apply_dropout:
        h = h * mask_ref[...]            # mask is pre-scaled: 0 or 1/(1-p)

    y = jnp.dot(h, w2_ref[...], preferred_element_type=jnp.float32)
    o_ref[...] = (y + b2_ref[...]).astype(o_ref.dtype)


@functools.partial(jax.jit,
                   static_argnames=("dropout_rate", "training", "tile_m_max"))
def positionwise_feed_forward(x, w1, b1, w2, b2, seed, *,
                              dropout_rate=0.1, training=False, tile_m_max=1024):
    """x: (..., d_model); w1: (d_model, d_ff); w2: (d_ff, d_model) — math layout,
    i.e. the transpose of PyTorch's nn.Linear.weight.  Biases stay f32."""
    assert 0.0 <= float(dropout_rate) < 1.0, "dropout_rate must be in [0, 1)"
    orig_shape = x.shape
    d_model = x.shape[-1]
    d_ff = w1.shape[-1]
    assert w1.shape == (d_model, d_ff) and w2.shape == (d_ff, d_model)

    dt = x.dtype
    itemsize = jnp.dtype(dt).itemsize
    apply_dropout = bool(training) and float(dropout_rate) > 0.0

    x2d = x.reshape(-1, d_model)
    M = x2d.shape[0]

    # ---- lane-dense feature dims: pad d_model / d_ff to multiples of 128 ----
    D_M = _round_up(d_model, 128)
    D_F = _round_up(d_ff, 128)

    # ---- tile_m selection: generation-aware VMEM budget, MXU-aligned rows ---
    kind = _device_kind()
    mxu_align = 128 if ("v5 lite" in kind or "v5e" in kind) else 256
    num_cores = 2 if "v7" in kind else 1
    sublane = max(8, 32 // max(1, itemsize))       # 8 rows for f32, 16 for bf16
    budget = int(0.70 * _vmem_capacity_bytes())
    w_bufs = 1 if _SINGLE_BUFFER_OK else 2

    def footprint(tm, wb):
        io = 2 * tm * (2 * D_M) * itemsize         # x + out tiles, double-buffered
        if apply_dropout:
            io += 2 * tm * D_F * itemsize          # mask tile, double-buffered
        w = wb * (D_M * D_F + D_F * D_M) * itemsize   # resident weights
        b = wb * (D_F + D_M) * 4                      # resident f32 biases (tiny)
        h = tm * D_F * 4                              # f32 intermediate
        return io + w + b + h + (2 << 20)             # + headroom

    def align(tm):
        if tm >= mxu_align:
            return _round_down(tm, mxu_align)
        return _round_up(tm, sublane)

    tile_m = align(min(int(tile_m_max), _round_up(M, sublane)))
    while tile_m > sublane and footprint(tile_m, w_bufs) > budget:
        tile_m = align(max(sublane, tile_m // 2))
    # v7x: give both TensorCores at least one row tile each.
    while num_cores > 1 and pl.cdiv(M, tile_m) < num_cores and tile_m > sublane:
        tile_m = max(sublane, _round_up(tile_m // 2, sublane))

    grid_m = pl.cdiv(M, tile_m)
    M_pad = grid_m * tile_m

    # ---- pad operands (zero padding is exact: padded rows/cols contribute 0) -
    x2d = jnp.pad(x2d, ((0, M_pad - M), (0, D_M - d_model))).astype(dt)
    w1p = jnp.pad(w1.astype(dt), ((0, D_M - d_model), (0, D_F - d_ff)))
    w2p = jnp.pad(w2.astype(dt), ((0, D_F - d_ff), (0, D_M - d_model)))
    b1p = jnp.pad(b1.reshape(1, d_ff).astype(jnp.float32),
                  ((0, 0), (0, D_F - d_ff)))
    b2p = jnp.pad(b2.reshape(1, d_model).astype(jnp.float32),
                  ((0, 0), (0, D_M - d_model)))

    in_specs = [
        pl.BlockSpec((tile_m, D_M), lambda i: (i, 0)),   # x row tile
        _resident_spec((D_M, D_F)),                      # W1 (resident)
        _resident_spec((1, D_F)),                        # b1 (f32, resident)
        _resident_spec((D_F, D_M)),                      # W2 (resident)
        _resident_spec((1, D_M)),                        # b2 (f32, resident)
    ]
    args = [x2d, w1p, b1p, w2p, b2p]

    if apply_dropout:
        # Wrapper-side inverted-dropout mask, pre-scaled by 1/(1-p).
        keep_scale = 1.0 / (1.0 - float(dropout_rate))
        u = jax.random.uniform(jax.random.PRNGKey(seed), (M_pad, D_F),
                               jnp.float32)
        mask = jnp.where(u >= jnp.float32(dropout_rate), keep_scale, 0.0).astype(dt)
        in_specs.append(pl.BlockSpec((tile_m, D_F), lambda i: (i, 0)))
        args.append(mask)

    kernel = functools.partial(_ffn_kernel, apply_dropout=apply_dropout)

    out2d = pl.pallas_call(
        kernel,
        out_shape=jax.ShapeDtypeStruct((M_pad, D_M), dt),
        grid_spec=pltpu.PrefetchScalarGridSpec(
            num_scalar_prefetch=0,
            grid=(grid_m,),
            in_specs=in_specs,
            out_specs=pl.BlockSpec((tile_m, D_M), lambda i: (i, 0)),
        ),
        compiler_params=pltpu.CompilerParams(
            dimension_semantics=("parallel",),
            # Conservative limit: covers double-buffered weights even if the
            # single-buffer hint is ignored by this jax/Mosaic version.
            vmem_limit_bytes=min(_vmem_capacity_bytes(),
                                 footprint(tile_m, 2) + (4 << 20)),
        ),
    )(*args)

    return out2d[:M, :d_model].reshape(orig_shape)


if __name__ == "__main__":
    # Small shapes consistent with the module: tokens = seq * batch, d_model, d_ff.
    S, B, D_MODEL, D_FF = 8, 2, 32, 64

    key = jax.random.PRNGKey(0)
    kx, kw1, kb1, kw2, kb2 = jax.random.split(key, 5)

    x = jax.random.normal(kx, (S, B, D_MODEL), dtype=jnp.float32)
    # nn.Linear-style small uniform init (values only need to be deterministic).
    w1 = jax.random.uniform(kw1, (D_MODEL, D_FF), jnp.float32, -1.0, 1.0) / math.sqrt(D_MODEL)
    b1 = jax.random.uniform(kb1, (D_FF,), jnp.float32, -1.0, 1.0) / math.sqrt(D_MODEL)
    w2 = jax.random.uniform(kw2, (D_FF, D_MODEL), jnp.float32, -1.0, 1.0) / math.sqrt(D_FF)
    b2 = jax.random.uniform(kb2, (D_MODEL,), jnp.float32, -1.0, 1.0) / math.sqrt(D_FF)

    seed = jnp.array(0, dtype=jnp.int32)

    # Eval-mode forward (dropout = identity): exact reference check.
    out = positionwise_feed_forward(x, w1, b1, w2, b2, seed,
                                    dropout_rate=0.1, training=False)
    out = jax.block_until_ready(out)

    ref = jnp.maximum(x @ w1 + b1, 0.0) @ w2 + b2
    assert out.shape == x.shape and out.dtype == x.dtype
    assert jnp.allclose(out, ref, atol=1e-4, rtol=1e-4), \
        float(jnp.max(jnp.abs(out - ref)))

    # Training-mode forward (wrapper-side mask, fused in-kernel multiply).
    # The RNG stream differs from torch's dropout RNG, so bitwise parity with
    # the PyTorch training forward is not reproducible; check shape/finiteness.
    out_tr = positionwise_feed_forward(x, w1, b1, w2, b2, seed,
                                       dropout_rate=0.1, training=True)
    out_tr = jax.block_until_ready(out_tr)
    assert out_tr.shape == x.shape and bool(jnp.all(jnp.isfinite(out_tr)))

    print("KERNEL_OK")
</pallas_src>

<mosaic_0001>
module attributes {stable_mosaic.version = 11 : i64} {
  func.func @_ffn_kernel(%arg0: i32, %arg1: memref<16x128xf32, #tpu.memory_space<vmem>>, %arg2: memref<128x128xf32, #tpu.memory_space<vmem>>, %arg3: memref<1x128xf32, #tpu.memory_space<vmem>>, %arg4: memref<128x128xf32, #tpu.memory_space<vmem>>, %arg5: memref<1x128xf32, #tpu.memory_space<vmem>>, %arg6: memref<16x128xf32, #tpu.memory_space<vmem>>) attributes {dimension_semantics = [#tpu.dimension_semantics<parallel>], iteration_bounds = array<i64: 1>, scalar_prefetch = 0 : i64, scratch_operands = 0 : i64, tpu.core_type = #tpu.core_type<tc>, window_params = [{transform_indices = @transform_0, window_bounds = array<i64: 16, 128>}, {pipeline_mode = #tpu.pipeline_mode<synchronous>, transform_indices = @transform_1, window_bounds = array<i64: 128, 128>}, {pipeline_mode = #tpu.pipeline_mode<synchronous>, transform_indices = @transform_2, window_bounds = array<i64: 1, 128>}, {pipeline_mode = #tpu.pipeline_mode<synchronous>, transform_indices = @transform_3, window_bounds = array<i64: 128, 128>}, {pipeline_mode = #tpu.pipeline_mode<synchronous>, transform_indices = @transform_4, window_bounds = array<i64: 1, 128>}, {transform_indices = @transform_5, window_bounds = array<i64: 16, 128>}]} {
    %c0 = arith.constant 0 : index
    %c0_0 = arith.constant 0 : index
    %0 = vector.load %arg1[%c0, %c0_0] : memref<16x128xf32, #tpu.memory_space<vmem>>, vector<16x128xf32>
    %c0_1 = arith.constant 0 : index
    %c0_2 = arith.constant 0 : index
    %1 = vector.load %arg2[%c0_1, %c0_2] : memref<128x128xf32, #tpu.memory_space<vmem>>, vector<128x128xf32>
    %cst = arith.constant dense<0.000000e+00> : vector<16x128xf32>
    %2 = tpu.matmul %0, %1, %cst {dimension_numbers = #tpu.dot_dimension_numbers<[1], [0], [0], [1], [0, 0, 1, 1], [], []>} : vector<16x128xf32>, vector<128x128xf32>, vector<16x128xf32> -> vector<16x128xf32>
    %c0_3 = arith.constant 0 : index
    %c0_4 = arith.constant 0 : index
    %3 = vector.load %arg3[%c0_3, %c0_4] : memref<1x128xf32, #tpu.memory_space<vmem>>, vector<1x128xf32>
    %4 = vector.broadcast %3 : vector<1x128xf32> to vector<16x128xf32>
    %5 = arith.addf %2, %4 : vector<16x128xf32>
    %cst_5 = arith.constant 0.000000e+00 : f32
    %6 = vector.broadcast %cst_5 : f32 to vector<16x128xf32>
    %7 = arith.maximumf %5, %6 : vector<16x128xf32>
    %c0_6 = arith.constant 0 : index
    %c0_7 = arith.constant 0 : index
    %8 = vector.load %arg4[%c0_6, %c0_7] : memref<128x128xf32, #tpu.memory_space<vmem>>, vector<128x128xf32>
    %cst_8 = arith.constant dense<0.000000e+00> : vector<16x128xf32>
    %9 = tpu.matmul %7, %8, %cst_8 {dimension_numbers = #tpu.dot_dimension_numbers<[1], [0], [0], [1], [0, 0, 1, 1], [], []>} : vector<16x128xf32>, vector<128x128xf32>, vector<16x128xf32> -> vector<16x128xf32>
    %c0_9 = arith.constant 0 : index
    %c0_10 = arith.constant 0 : index
    %10 = vector.load %arg5[%c0_9, %c0_10] : memref<1x128xf32, #tpu.memory_space<vmem>>, vector<1x128xf32>
    %11 = vector.broadcast %10 : vector<1x128xf32> to vector<16x128xf32>
    %12 = arith.addf %9, %11 : vector<16x128xf32>
    %c0_11 = arith.constant 0 : index
    %c0_12 = arith.constant 0 : index
    %13 = vector.load %arg6[%c0_11, %c0_12] : memref<16x128xf32, #tpu.memory_space<vmem>>, vector<16x128xf32>
    tpu.vector_store %arg6[%c0_11, %c0_12], %12 {strides = array<i32>} : memref<16x128xf32, #tpu.memory_space<vmem>>, vector<16x128xf32>,
    return
  }
  func.func @transform_0(%arg0: i32) -> (i32, i32) {
    %c0_i32 = arith.constant 0 : i32
    %c0_i32_0 = arith.constant 0 : i32
    return %arg0, %c0_i32 : i32, i32
  }
  func.func @transform_1(%arg0: i32) -> (i32, i32) {
    %c0_i32 = arith.constant 0 : i32
    %c0_i32_0 = arith.constant 0 : i32
    %c0_i32_1 = arith.constant 0 : i32
    return %c0_i32, %c0_i32_0 : i32, i32
  }
  func.func @transform_2(%arg0: i32) -> (i32, i32) {
    %c0_i32 = arith.constant 0 : i32
    %c0_i32_0 = arith.constant 0 : i32
    %c0_i32_1 = arith.constant 0 : i32
    return %c0_i32, %c0_i32_0 : i32, i32
  }
  func.func @transform_3(%arg0: i32) -> (i32, i32) {
    %c0_i32 = arith.constant 0 : i32
    %c0_i32_0 = arith.constant 0 : i32
    %c0_i32_1 = arith.constant 0 : i32
    return %c0_i32, %c0_i32_0 : i32, i32
  }
  func.func @transform_4(%arg0: i32) -> (i32, i32) {
    %c0_i32 = arith.constant 0 : i32
    %c0_i32_0 = arith.constant 0 : i32
    %c0_i32_1 = arith.constant 0 : i32
    return %c0_i32, %c0_i32_0 : i32, i32
  }
  func.func @transform_5(%arg0: i32) -> (i32, i32) {
    %c0_i32 = arith.constant 0 : i32
    %c0_i32_0 = arith.constant 0 : i32
    return %arg0, %c0_i32 : i32, i32
  }
}

</mosaic_0001>

<llo_original>
// kernel: positionwise_feed_forward.1
$region0: #{positionwise_feed_forward.1}
  #allocation0 [shape = 'u32[]', space=smem, size = 0x4, offset = 0x4, fixed_abs, tag = 'smem constant byte address 0x4 - core index']
  #allocation1 [shape = 'u32[144,128]{1,0:T(1,128)}', space=vmem, size = 0x12000, scoped, tag = 'internal scratch']
  %s0 = inlined_call_operand.vmem [shape: f32[16,128], index: 0, kind: input, shape index: {}]
  %s1 = inlined_call_operand.vmem [shape: f32[128,128], index: 1, kind: input, shape index: {}]
  %s2 = inlined_call_operand.vmem [shape: f32[1,128], index: 2, kind: input, shape index: {}]
  %s3 = inlined_call_operand.vmem [shape: f32[128,128], index: 3, kind: input, shape index: {}]
  %s4 = inlined_call_operand.vmem [shape: f32[1,128], index: 4, kind: input, shape index: {}]
  %s5 = inlined_call_operand.hbm [shape: f32[16,128], index: 5, kind: output, shape index: {}]
  %s6 = sld [smem:[#allocation0]]
  $region30: #{positionwise_feed_forward.1} parent=0
    _
  %s8 = ssub.s32 1, %s6
  %s9 = scalar_select 0, %s8, %s6
  $region1: #{positionwise_feed_forward.1} parent=0
    #allocation2 [shape = 'u8[8192]{0}', space=vmem, size = 0x2000, scoped, tag = 'output window, operand 0, single buffered']
    #allocation3 [shape = 's32[1]{0}', space=sflag, size = 0x4, scoped, tag = 'scoped memory for positionwise_feed_forward.1']
    %10 = vsyncpa [#allocation3], 0
    // Predicated region
    $region2: #{positionwise_feed_forward.1} parent=1 // pred_check
      _
    $region3: #{positionwise_feed_forward.1} parent=1 // pred_check_branch
      %12 = sbr.rel (0) target = $region5
    $region4: #{positionwise_feed_forward.1} parent=1 // pred_region
      _
    $region5: #{positionwise_feed_forward.1} parent=1 // pred_fallthru
      _
    // Predicated region
    $region6: #{positionwise_feed_forward.1} parent=1 // pred_check
      _
    $region7: #{positionwise_feed_forward.1} parent=1 // pred_check_branch
      %14 = sbr.rel (0) target = $region9
    $region8: #{positionwise_feed_forward.1} parent=1 // pred_region
      _
    $region9: #{positionwise_feed_forward.1} parent=1 // pred_fallthru
      _
    // Predicated region
    $region10: #{positionwise_feed_forward.1} parent=1 // pred_check
      _
    $region11: #{positionwise_feed_forward.1} parent=1 // pred_check_branch
      %16 = sbr.rel (0) target = $region13
    $region12: #{positionwise_feed_forward.1} parent=1 // pred_region
      _
    $region13: #{positionwise_feed_forward.1} parent=1 // pred_fallthru
      _
    // Predicated region
    $region14: #{positionwise_feed_forward.1} parent=1 // pred_check
      _
    $region15: #{positionwise_feed_forward.1} parent=1 // pred_check_branch
      %18 = sbr.rel (0) target = $region17
    $region16: #{positionwise_feed_forward.1} parent=1 // pred_region
      _
    $region17: #{positionwise_feed_forward.1} parent=1 // pred_fallthru
      _
    // Predicated region
    $region18: #{positionwise_feed_forward.1} parent=1 // pred_check
      _
    $region19: #{positionwise_feed_forward.1} parent=1 // pred_check_branch
      %20 = sbr.rel (0) target = $region21
    $region20: #{positionwise_feed_forward.1} parent=1 // pred_region
      _
    $region21: #{positionwise_feed_forward.1} parent=1 // pred_fallthru
      _
    %v21 = vld [vmem:[%s0] sm:$0xff]
    %v22 = vld [vmem:[%s0 + $0x8] sm:$0xff]
    %v23 = vld [vmem:[%s1] sm:$0xff]
    %v24 = vld [vmem:[%s1 + $0x8] sm:$0xff]
    %v25 = vld [vmem:[%s1 + $0x10] sm:$0xff]
    %v26 = vld [vmem:[%s1 + $0x18] sm:$0xff]
    %v27 = vld [vmem:[%s1 + $0x20] sm:$0xff]
    %v28 = vld [vmem:[%s1 + $0x28] sm:$0xff]
    %v29 = vld [vmem:[%s1 + $0x30] sm:$0xff]
    %v30 = vld [vmem:[%s1 + $0x38] sm:$0xff]
    %v31 = vld [vmem:[%s1 + $0x40] sm:$0xff]
    %v32 = vld [vmem:[%s1 + $0x48] sm:$0xff]
    %v33 = vld [vmem:[%s1 + $0x50] sm:$0xff]
    %v34 = vld [vmem:[%s1 + $0x58] sm:$0xff]
    %v35 = vld [vmem:[%s1 + $0x60] sm:$0xff]
    %v36 = vld [vmem:[%s1 + $0x68] sm:$0xff]
    %v37 = vld [vmem:[%s1 + $0x70] sm:$0xff]
    %v38 = vld [vmem:[%s1 + $0x78] sm:$0xff]
    %v39 = vld [vmem:[%s2] sm:$0x1]
    %v41 = vlaneseq
    %v42 = vshrl.u32 %v41, 7
    %v43 = vsub.s32 0, %v42
    %v44 = vrot.slane %v39, %v43
    %46 = vmatprep.subr.mxu0 0.0
    %47 = vmatpush1.msra.mxu0 %v38
    %48 = vmatprep.subr.mxu0 0.0
    %49 = vmatpush1.msra.mxu0 %v37
    %50 = vmatprep.subr.mxu0 0.0
    %51 = vmatpush1.msra.mxu0 %v36
    %52 = vmatprep.subr.mxu0 0.0
    %53 = vmatpush1.msra.mxu0 %v35
    %54 = vmatprep.subr.mxu0 0.0
    %55 = vmatpush1.msra.mxu0 %v34
    %56 = vmatprep.subr.mxu0 0.0
    %57 = vmatpush1.msra.mxu0 %v33
    %58 = vmatprep.subr.mxu0 0.0
    %59 = vmatpush1.msra.mxu0 %v32
    %60 = vmatprep.subr.mxu0 0.0
    %61 = vmatpush1.msra.mxu0 %v31
    %62 = vmatprep.subr.mxu0 0.0
    %63 = vmatpush1.msra.mxu0 %v30
    %64 = vmatprep.subr.mxu0 0.0
    %65 = vmatpush1.msra.mxu0 %v29
    %66 = vmatprep.subr.mxu0 0.0
    %67 = vmatpush1.msra.mxu0 %v28
    %68 = vmatprep.subr.mxu0 0.0
    %69 = vmatpush1.msra.mxu0 %v27
    %70 = vmatprep.subr.mxu0 0.0
    %71 = vmatpush1.msra.mxu0 %v26
    %72 = vmatprep.subr.mxu0 0.0
    %73 = vmatpush1.msra.mxu0 %v25
    %74 = vmatprep.subr.mxu0 0.0
    %75 = vmatpush1.msra.mxu0 %v24
    %76 = vmatprep.subr.mxu0 0.0
    %77 = vmatpush1.msra.mxu0 %v23
    %78 = vmatprep.subr.mxu0 0.0
    %79 = vmatpush2.msra.mxu0 0.0
    %80 = vmatprep.subr.mxu0 0.0
    %81 = vmatpush2.msra.mxu0 0.0
    %82 = vmatprep.subr.mxu0 0.0
    %83 = vmatpush2.msra.mxu0 0.0
    %84 = vmatprep.subr.mxu0 0.0
    %85 = vmatpush2.msra.mxu0 0.0
    %86 = vmatprep.subr.mxu0 0.0
    %87 = vmatpush2.msra.mxu0 0.0
    %88 = vmatprep.subr.mxu0 0.0
    %89 = vmatpush2.msra.mxu0 0.0
    %90 = vmatprep.subr.mxu0 0.0
    %91 = vmatpush2.msra.mxu0 0.0
    %92 = vmatprep.subr.mxu0 0.0
    %93 = vmatpush2.msra.mxu0 0.0
    %94 = vmatprep.subr.mxu0 0.0
    %95 = vmatpush2.msra.mxu0 0.0
    %96 = vmatprep.subr.mxu0 0.0
    %97 = vmatpush2.msra.mxu0 0.0
    %98 = vmatprep.subr.mxu0 0.0
    %99 = vmatpush2.msra.mxu0 0.0
    %100 = vmatprep.subr.mxu0 0.0
    %101 = vmatpush2.msra.mxu0 0.0
    %102 = vmatprep.subr.mxu0 0.0
    %103 = vmatpush2.msra.mxu0 0.0
    %104 = vmatprep.subr.mxu0 0.0
    %105 = vmatpush2.msra.mxu0 0.0
    %106 = vmatprep.subr.mxu0 0.0
    %107 = vmatpush2.msra.mxu0 0.0
    %108 = vmatprep.subr.mxu0 0.0
    %109 = vmatpush2.msra.mxu0 0.0
    %110 = vmatprep.mubr.f32.mxu0 0.0
    %111 = vmatmul.mubr.f32.gmra.mxu0 %v21
    %v112 = vpop.f32.mrf.mxu0
    %v113 = vadd.f32 %v44, %v112
    %v114 = vpop.f32.mrf.mxu0
    %115 = vmatprep.mubr.f32.mxu0 0.0
    %116 = vmatmul.mubr.f32.gmra.mxu0 %v22
    %v117 = vpop.f32.mrf.mxu0
    %v118 = vadd.f32 %v44, %v117
    %v119 = vpop.f32.mrf.mxu0
    %120 = vdwg.mxu0
    %v121 = vmax.f32 %v113, 0.0
    %v122 = vmax.f32 %v118, 0.0
    %v123 = vld [vmem:[%s3] sm:$0xff]
    %v124 = vld [vmem:[%s3 + $0x8] sm:$0xff]
    %v125 = vld [vmem:[%s3 + $0x10] sm:$0xff]
    %v126 = vld [vmem:[%s3 + $0x18] sm:$0xff]
    %v127 = vld [vmem:[%s3 + $0x20] sm:$0xff]
    %v128 = vld [vmem:[%s3 + $0x28] sm:$0xff]
    %v129 = vld [vmem:[%s3 + $0x30] sm:$0xff]
    %v130 = vld [vmem:[%s3 + $0x38] sm:$0xff]
    %v131 = vld [vmem:[%s3 + $0x40] sm:$0xff]
    %v132 = vld [vmem:[%s3 + $0x48] sm:$0xff]
    %v133 = vld [vmem:[%s3 + $0x50] sm:$0xff]
    %v134 = vld [vmem:[%s3 + $0x58] sm:$0xff]
    %v135 = vld [vmem:[%s3 + $0x60] sm:$0xff]
    %v136 = vld [vmem:[%s3 + $0x68] sm:$0xff]
    %v137 = vld [vmem:[%s3 + $0x70] sm:$0xff]
    %v138 = vld [vmem:[%s3 + $0x78] sm:$0xff]
    %v139 = vld [vmem:[%s4] sm:$0x1]
    %v141 = vlaneseq
    %v142 = vshrl.u32 %v141, 7
    %v143 = vsub.s32 0, %v142
    %v144 = vrot.slane %v139, %v143
    %146 = vmatprep.subr.mxu0 0.0
    %147 = vmatpush1.msra.mxu0 %v138
    %148 = vmatprep.subr.mxu0 0.0
    %149 = vmatpush1.msra.mxu0 %v137
    %150 = vmatprep.subr.mxu0 0.0
    %151 = vmatpush1.msra.mxu0 %v136
    %152 = vmatprep.subr.mxu0 0.0
    %153 = vmatpush1.msra.mxu0 %v135
    %154 = vmatprep.subr.mxu0 0.0
    %155 = vmatpush1.msra.mxu0 %v134
    %156 = vmatprep.subr.mxu0 0.0
    %157 = vmatpush1.msra.mxu0 %v133
    %158 = vmatprep.subr.mxu0 0.0
    %159 = vmatpush1.msra.mxu0 %v132
    %160 = vmatprep.subr.mxu0 0.0
    %161 = vmatpush1.msra.mxu0 %v131
    %162 = vmatprep.subr.mxu0 0.0
    %163 = vmatpush1.msra.mxu0 %v130
    %164 = vmatprep.subr.mxu0 0.0
    %165 = vmatpush1.msra.mxu0 %v129
    %166 = vmatprep.subr.mxu0 0.0
    %167 = vmatpush1.msra.mxu0 %v128
    %168 = vmatprep.subr.mxu0 0.0
    %169 = vmatpush1.msra.mxu0 %v127
    %170 = vmatprep.subr.mxu0 0.0
    %171 = vmatpush1.msra.mxu0 %v126
    %172 = vmatprep.subr.mxu0 0.0
    %173 = vmatpush1.msra.mxu0 %v125
    %174 = vmatprep.subr.mxu0 0.0
    %175 = vmatpush1.msra.mxu0 %v124
    %176 = vmatprep.subr.mxu0 0.0
    %177 = vmatpush1.msra.mxu0 %v123
    %178 = vmatprep.subr.mxu0 0.0
    %179 = vmatpush2.msra.mxu0 0.0
    %180 = vmatprep.subr.mxu0 0.0
    %181 = vmatpush2.msra.mxu0 0.0
    %182 = vmatprep.subr.mxu0 0.0
    %183 = vmatpush2.msra.mxu0 0.0
    %184 = vmatprep.subr.mxu0 0.0
    %185 = vmatpush2.msra.mxu0 0.0
    %186 = vmatprep.subr.mxu0 0.0
    %187 = vmatpush2.msra.mxu0 0.0
    %188 = vmatprep.subr.mxu0 0.0
    %189 = vmatpush2.msra.mxu0 0.0
    %190 = vmatprep.subr.mxu0 0.0
    %191 = vmatpush2.msra.mxu0 0.0
    %192 = vmatprep.subr.mxu0 0.0
    %193 = vmatpush2.msra.mxu0 0.0
    %194 = vmatprep.subr.mxu0 0.0
    %195 = vmatpush2.msra.mxu0 0.0
    %196 = vmatprep.subr.mxu0 0.0
    %197 = vmatpush2.msra.mxu0 0.0
    %198 = vmatprep.subr.mxu0 0.0
    %199 = vmatpush2.msra.mxu0 0.0
    %200 = vmatprep.subr.mxu0 0.0
    %201 = vmatpush2.msra.mxu0 0.0
    %202 = vmatprep.subr.mxu0 0.0
    %203 = vmatpush2.msra.mxu0 0.0
    %204 = vmatprep.subr.mxu0 0.0
    %205 = vmatpush2.msra.mxu0 0.0
    %206 = vmatprep.subr.mxu0 0.0
    %207 = vmatpush2.msra.mxu0 0.0
    %208 = vmatprep.subr.mxu0 0.0
    %209 = vmatpush2.msra.mxu0 0.0
    %210 = vmatprep.mubr.f32.mxu0 0.0
    %211 = vmatmul.mubr.f32.gmra.mxu0 %v121
    %v212 = vpop.f32.mrf.mxu0
    %v213 = vadd.f32 %v144, %v212
    %v214 = vpop.f32.mrf.mxu0
    %215 = vmatprep.mubr.f32.mxu0 0.0
    %216 = vmatmul.mubr.f32.gmra.mxu0 %v122
    %v217 = vpop.f32.mrf.mxu0
    %v218 = vadd.f32 %v144, %v217
    %v219 = vpop.f32.mrf.mxu0
    %220 = vdwg.mxu0
    %221 = vst [vmem:[#allocation2] sm:$0xff] %v213
    %222 = vst [vmem:[#allocation2 + $0x8] sm:$0xff] %v218
    // Predicated region
    $region22: #{positionwise_feed_forward.1} parent=1 // pred_check
      _
    $region23: #{positionwise_feed_forward.1} parent=1 // pred_check_branch
      %224 = sbr.rel (0) target = $region25
    $region24: #{positionwise_feed_forward.1} parent=1 // pred_region
      %s226 = ssub.s32 256, 256
      %227 = vsyncadd [#allocation3], %s226
      %s228 = sshll.u32 [#allocation2], 4
      %s229 = int_to_ptr.vmem [resolvable:$true] %s228
      %234 = dma.vmem_to_hbm [thread:$0]  %s229, 256, %s5, [#allocation3], 128, 128, 8
    $region25: #{positionwise_feed_forward.1} parent=1 // pred_fallthru
      _
    // Predicated region
    $region26: #{positionwise_feed_forward.1} parent=1 // pred_check
      _
    $region27: #{positionwise_feed_forward.1} parent=1 // pred_check_branch
      %236 = sbr.rel (0) target = $region29
    $region28: #{positionwise_feed_forward.1} parent=1 // pred_region
      %237 = dma.done [#allocation3], 256
    $region29: #{positionwise_feed_forward.1} parent=1 // pred_fallthru
      _
    %238 = vsyncpa [#allocation3], 1

</llo_original>
